<compile_context>
chip_gen: v7x
topology: tpu7x:2x2x1
jax: 0.10.0
libtpu: 0.0.40
codegen_flags: <defaults>
</compile_context>

<pallas_src>
import functools

import jax
import jax.numpy as jnp
import numpy as np
from jax.experimental import pallas as pl
from jax.experimental.pallas import tpu as pltpu


def _dice_sums_kernel(apply_sigmoid, p_ref, g_ref, inter_ref, union_ref):
    """Per grid step: accumulate sum(p*g) and sum(p+g) over one H-tile."""
    k = pl.program_id(2)

    @pl.when(k == 0)
    def _():
        inter_ref[...] = jnp.zeros_like(inter_ref)
        union_ref[...] = jnp.zeros_like(union_ref)

    # Leading (batch, channel) dims are squeezed by the BlockSpec -> (th, W).
    p = p_ref[...].astype(jnp.float32)
    g = g_ref[...].astype(jnp.float32)
    if apply_sigmoid:          # static Python bool, resolved at trace time
        p = jax.nn.sigmoid(p)  # EUP work, hidden under the HBM loads

    inter_ref[...] += jnp.sum(p * g)
    union_ref[...] += jnp.sum(p + g)


def _choose_h_tile(H, W, itemsize, target_bytes=2 << 20):
    """Largest multiple-of-8 divisor of H whose (th, W) block is ~<= 2 MiB."""
    if H % 8 != 0:
        return H  # full-H blocks satisfy the (8,128)/full-dim rule
    th = 8
    cap = max(8, target_bytes // max(1, W * itemsize))
    while th * 2 <= min(H, cap) and H % (th * 2) == 0:
        th *= 2
    return th


def soft_dice_loss(y_pred, y_true, num_classes, eps=1e-5, activation=None):
    """Pallas implementation of SoftDiceLoss.forward. Returns a scalar f32."""
    assert y_pred.shape == y_true.shape
    B, C, H, W = y_pred.shape
    assert C >= num_classes + 1, "SoftDiceLoss indexes channels 1..num_classes"

    if activation in (None, "none"):
        apply_sigmoid = False
    elif activation == "sigmoid":
        apply_sigmoid = True
    else:
        # TODO(synk): 'softmax2d' (nn.Softmax2d cross-channel softmax) not implemented.
        raise NotImplementedError("Activation implemented for None and 'sigmoid'")

    itemsize = max(int(jnp.dtype(y_pred.dtype).itemsize),
                   int(jnp.dtype(y_true.dtype).itemsize))
    th = _choose_h_tile(H, W, itemsize)
    kh = H // th

    kernel = functools.partial(_dice_sums_kernel, apply_sigmoid)

    # Channel slice [:, 1:num_classes+1] is fused into the index_map (c + 1);
    # leading batch/channel dims are squeezed out of the kernel refs.
    blk_in = pl.BlockSpec((None, None, th, W), lambda c, b, k: (b, c + 1, k, 0))
    # Per-(class, batch) scalar sums; the block covers the full trailing
    # (1, 1) dims and stays VMEM-resident across the k reduction axis.
    blk_out = pl.BlockSpec((1, 1, 1, 1), lambda c, b, k: (c, b, 0, 0))

    sums_shape = jax.ShapeDtypeStruct((num_classes, B, 1, 1), jnp.float32)

    inter, union = pl.pallas_call(
        kernel,
        out_shape=(sums_shape, sums_shape),
        grid_spec=pltpu.PrefetchScalarGridSpec(
            num_scalar_prefetch=0,
            grid=(num_classes, B, kh),
            in_specs=[blk_in, blk_in],
            out_specs=[blk_out, blk_out],
        ),
        compiler_params=pltpu.CompilerParams(
            dimension_semantics=("parallel", "parallel", "arbitrary")
        ),
    )(y_pred, y_true)

    inter = inter.reshape(num_classes, B)
    union = union.reshape(num_classes, B)

    # Tiny epilogue (num_classes * B values) in plain JAX.
    dice = (2.0 * inter + eps) / (union + eps)   # per (class, sample)
    class_dice = jnp.mean(dice, axis=1)          # == loss.sum() / N per class
    mean_dice = jnp.mean(class_dice)             # mean over classes
    return 1.0 - mean_dice


def soft_dice_loss_reference(y_pred, y_true, num_classes, eps=1e-5, activation=None):
    """Pure-JAX reference mirroring the PyTorch code structure."""
    def dice_coeff(pred, gt):
        if activation in (None, "none"):
            pass
        elif activation == "sigmoid":
            pred = jax.nn.sigmoid(pred)
        else:
            raise NotImplementedError
        N = gt.shape[0]
        pred_flat = pred.reshape(N, -1)
        gt_flat = gt.reshape(N, -1)
        intersection = (pred_flat * gt_flat).sum(1)
        unionset = pred_flat.sum(1) + gt_flat.sum(1)
        loss = (2 * intersection + eps) / (unionset + eps)
        return loss.sum() / N

    class_dice = []
    for i in range(1, num_classes + 1):
        class_dice.append(dice_coeff(y_pred[:, i, :, :], y_true[:, i, :, :]))
    mean_dice = sum(class_dice) / len(class_dice)
    return 1 - mean_dice


if __name__ == "__main__":
    key = jax.random.PRNGKey(0)
    k1, k2 = jax.random.split(key)
    B, C, H, W = 2, 4, 16, 16
    num_classes = 3  # uses channels 1..3

    y_pred = jax.random.uniform(k1, (B, C, H, W), dtype=jnp.float32)
    y_true = jax.random.uniform(k2, (B, C, H, W), dtype=jnp.float32)

    # Default activation (None) — matches SoftDiceLoss() defaults.
    loss = jax.block_until_ready(
        soft_dice_loss(y_pred, y_true, num_classes=num_classes))
    ref = jax.block_until_ready(
        soft_dice_loss_reference(y_pred, y_true, num_classes=num_classes))
    np.testing.assert_allclose(np.asarray(loss), np.asarray(ref),
                               rtol=1e-5, atol=1e-5)

    # Sigmoid activation path.
    loss_s = jax.block_until_ready(
        soft_dice_loss(y_pred, y_true, num_classes=num_classes,
                       activation="sigmoid"))
    ref_s = jax.block_until_ready(
        soft_dice_loss_reference(y_pred, y_true, num_classes=num_classes,
                                 activation="sigmoid"))
    np.testing.assert_allclose(np.asarray(loss_s), np.asarray(ref_s),
                               rtol=1e-5, atol=1e-5)

    print("KERNEL_OK")
</pallas_src>

<mosaic_0001>
module attributes {stable_mosaic.version = 11 : i64} {
  func.func @_dice_sums_kernel(%arg0: i32, %arg1: i32, %arg2: i32, %arg3: memref<1x1x16x16xf32, #tpu.memory_space<vmem>>, %arg4: memref<1x1x16x16xf32, #tpu.memory_space<vmem>>, %arg5: memref<1x1x1x1xf32, #tpu.memory_space<vmem>>, %arg6: memref<1x1x1x1xf32, #tpu.memory_space<vmem>>) attributes {dimension_semantics = [#tpu.dimension_semantics<parallel>, #tpu.dimension_semantics<parallel>, #tpu.dimension_semantics<arbitrary>], iteration_bounds = array<i64: 3, 2, 1>, scalar_prefetch = 0 : i64, scratch_operands = 0 : i64, tpu.core_type = #tpu.core_type<tc>, window_params = [{transform_indices = @transform_0, window_bounds = array<i64: 1, 1, 16, 16>}, {transform_indices = @transform_1, window_bounds = array<i64: 1, 1, 16, 16>}, {transform_indices = @transform_2, window_bounds = array<i64: 1, 1, 1, 1>}, {transform_indices = @transform_3, window_bounds = array<i64: 1, 1, 1, 1>}]} {
    %c0_i32 = arith.constant 0 : i32
    %0 = arith.cmpi eq, %arg2, %c0_i32 : i32
    %1 = arith.extui %0 : i1 to i32
    %c0_i32_0 = arith.constant 0 : i32
    %2 = arith.cmpi ne, %1, %c0_i32_0 : i32
    scf.if %2 {
      %cst_25 = arith.constant 0.000000e+00 : f32
      %25 = vector.broadcast %cst_25 : f32 to vector<1x1x1x1xf32>
      %c0_26 = arith.constant 0 : index
      %c0_27 = arith.constant 0 : index
      %c0_28 = arith.constant 0 : index
      %c0_29 = arith.constant 0 : index
      %26 = vector.load %arg5[%c0_26, %c0_27, %c0_28, %c0_29] : memref<1x1x1x1xf32, #tpu.memory_space<vmem>>, vector<1x1x1x1xf32>
      tpu.vector_store %arg5[%c0_26, %c0_27, %c0_28, %c0_29], %25 {strides = array<i32>} : memref<1x1x1x1xf32, #tpu.memory_space<vmem>>, vector<1x1x1x1xf32>,
      %cst_30 = arith.constant 0.000000e+00 : f32
      %27 = vector.broadcast %cst_30 : f32 to vector<1x1x1x1xf32>
      %c0_31 = arith.constant 0 : index
      %c0_32 = arith.constant 0 : index
      %c0_33 = arith.constant 0 : index
      %c0_34 = arith.constant 0 : index
      %28 = vector.load %arg6[%c0_31, %c0_32, %c0_33, %c0_34] : memref<1x1x1x1xf32, #tpu.memory_space<vmem>>, vector<1x1x1x1xf32>
      tpu.vector_store %arg6[%c0_31, %c0_32, %c0_33, %c0_34], %27 {strides = array<i32>} : memref<1x1x1x1xf32, #tpu.memory_space<vmem>>, vector<1x1x1x1xf32>,
    } else {
    }
    %c0 = arith.constant 0 : index
    %c0_1 = arith.constant 0 : index
    %c0_2 = arith.constant 0 : index
    %c0_3 = arith.constant 0 : index
    %3 = vector.load %arg3[%c0, %c0_1, %c0_2, %c0_3] : memref<1x1x16x16xf32, #tpu.memory_space<vmem>>, vector<1x1x16x16xf32>
    %4 = vector.shape_cast %3 : vector<1x1x16x16xf32> to vector<16x16xf32>
    %c0_4 = arith.constant 0 : index
    %c0_5 = arith.constant 0 : index
    %c0_6 = arith.constant 0 : index
    %c0_7 = arith.constant 0 : index
    %5 = vector.load %arg4[%c0_4, %c0_5, %c0_6, %c0_7] : memref<1x1x16x16xf32, #tpu.memory_space<vmem>>, vector<1x1x16x16xf32>
    %6 = vector.shape_cast %5 : vector<1x1x16x16xf32> to vector<16x16xf32>
    %c0_8 = arith.constant 0 : index
    %c0_9 = arith.constant 0 : index
    %c0_10 = arith.constant 0 : index
    %c0_11 = arith.constant 0 : index
    %7 = vector.load %arg5[%c0_8, %c0_9, %c0_10, %c0_11] : memref<1x1x1x1xf32, #tpu.memory_space<vmem>>, vector<1x1x1x1xf32>
    %8 = arith.mulf %4, %6 : vector<16x16xf32>
    %9 = vector.shape_cast %8 : vector<16x16xf32> to vector<1x16x16xf32>
    %cst = arith.constant dense<0.000000e+00> : vector<1xf32>
    %10 = vector.multi_reduction <add>, %9, %cst [1, 2] : vector<1x16x16xf32> to vector<1xf32>
    %11 = vector.shape_cast %10 : vector<1xf32> to vector<1x1x1xf32>
    %12 = vector.extract %11[0, 0, 0] : f32 from vector<1x1x1xf32>
    %13 = vector.broadcast %12 : f32 to vector<1x1x1x1xf32>
    %14 = arith.addf %7, %13 : vector<1x1x1x1xf32>
    %c0_12 = arith.constant 0 : index
    %c0_13 = arith.constant 0 : index
    %c0_14 = arith.constant 0 : index
    %c0_15 = arith.constant 0 : index
    %15 = vector.load %arg5[%c0_12, %c0_13, %c0_14, %c0_15] : memref<1x1x1x1xf32, #tpu.memory_space<vmem>>, vector<1x1x1x1xf32>
    tpu.vector_store %arg5[%c0_12, %c0_13, %c0_14, %c0_15], %14 {strides = array<i32>} : memref<1x1x1x1xf32, #tpu.memory_space<vmem>>, vector<1x1x1x1xf32>,
    %c0_16 = arith.constant 0 : index
    %c0_17 = arith.constant 0 : index
    %c0_18 = arith.constant 0 : index
    %c0_19 = arith.constant 0 : index
    %16 = vector.load %arg6[%c0_16, %c0_17, %c0_18, %c0_19] : memref<1x1x1x1xf32, #tpu.memory_space<vmem>>, vector<1x1x1x1xf32>
    %17 = arith.addf %4, %6 : vector<16x16xf32>
    %18 = vector.shape_cast %17 : vector<16x16xf32> to vector<1x16x16xf32>
    %cst_20 = arith.constant dense<0.000000e+00> : vector<1xf32>
    %19 = vector.multi_reduction <add>, %18, %cst_20 [1, 2] : vector<1x16x16xf32> to vector<1xf32>
    %20 = vector.shape_cast %19 : vector<1xf32> to vector<1x1x1xf32>
    %21 = vector.extract %20[0, 0, 0] : f32 from vector<1x1x1xf32>
    %22 = vector.broadcast %21 : f32 to vector<1x1x1x1xf32>
    %23 = arith.addf %16, %22 : vector<1x1x1x1xf32>
    %c0_21 = arith.constant 0 : index
    %c0_22 = arith.constant 0 : index
    %c0_23 = arith.constant 0 : index
    %c0_24 = arith.constant 0 : index
    %24 = vector.load %arg6[%c0_21, %c0_22, %c0_23, %c0_24] : memref<1x1x1x1xf32, #tpu.memory_space<vmem>>, vector<1x1x1x1xf32>
    tpu.vector_store %arg6[%c0_21, %c0_22, %c0_23, %c0_24], %23 {strides = array<i32>} : memref<1x1x1x1xf32, #tpu.memory_space<vmem>>, vector<1x1x1x1xf32>,
    return
  }
  func.func @transform_0(%arg0: i32, %arg1: i32, %arg2: i32) -> (i32, i32, i32, i32) {
    %c1_i32 = arith.constant 1 : i32
    %0 = arith.addi %arg0, %c1_i32 : i32
    %c0_i32 = arith.constant 0 : i32
    %c0_i32_0 = arith.constant 0 : i32
    return %arg1, %0, %arg2, %c0_i32 : i32, i32, i32, i32
  }
  func.func @transform_1(%arg0: i32, %arg1: i32, %arg2: i32) -> (i32, i32, i32, i32) {
    %c1_i32 = arith.constant 1 : i32
    %0 = arith.addi %arg0, %c1_i32 : i32
    %c0_i32 = arith.constant 0 : i32
    %c0_i32_0 = arith.constant 0 : i32
    return %arg1, %0, %arg2, %c0_i32 : i32, i32, i32, i32
  }
  func.func @transform_2(%arg0: i32, %arg1: i32, %arg2: i32) -> (i32, i32, i32, i32) {
    %c0_i32 = arith.constant 0 : i32
    %c0_i32_0 = arith.constant 0 : i32
    %c0_i32_1 = arith.constant 0 : i32
    return %arg0, %arg1, %c0_i32, %c0_i32_0 : i32, i32, i32, i32
  }
  func.func @transform_3(%arg0: i32, %arg1: i32, %arg2: i32) -> (i32, i32, i32, i32) {
    %c0_i32 = arith.constant 0 : i32
    %c0_i32_0 = arith.constant 0 : i32
    %c0_i32_1 = arith.constant 0 : i32
    return %arg0, %arg1, %c0_i32, %c0_i32_0 : i32, i32, i32, i32
  }
}

</mosaic_0001>

<llo_original>
// kernel: tpu_custom_call.1
$region0: #{tpu_custom_call.1}
  #allocation0 [shape = 'u32[]', space=smem, size = 0x4, offset = 0x4, fixed_abs, tag = 'smem constant byte address 0x4 - core index']
  #allocation1 [shape = 'u32[144,128]{1,0:T(1,128)}', space=vmem, size = 0x12000, scoped, tag = 'internal scratch']
  %s0 = inlined_call_operand.hbm [shape: f32[2,4,16,16], index: 0, kind: input, shape index: {}]
  %s1 = inlined_call_operand.hbm [shape: f32[2,4,16,16], index: 1, kind: input, shape index: {}]
  %s2 = inlined_call_operand.vmem [shape: f32[3,2,1,1], index: 2, kind: output, shape index: {0}]
  %s3 = inlined_call_operand.vmem [shape: f32[3,2,1,1], index: 3, kind: output, shape index: {1}]
  %4 = xla_tuple %s2, %s3
  %s5 = sld [smem:[#allocation0]]
  $region61: #{tpu_custom_call.1} parent=0
    _
  %s7 = ssub.s32 1, %s5
  %s8 = scalar_select 0, %s7, %s5
  $region1: #{tpu_custom_call.1} parent=0
    #allocation2 [shape = 'u8[16384]{0}', space=vmem, size = 0x4000, scoped, tag = 'input window, operand 0']
    #allocation3 [shape = 's32[2]{0}', space=sflag, size = 0x8, scoped, tag = 'scoped memory for tpu_custom_call.1']
    #allocation4 [shape = 'u8[16384]{0}', space=vmem, size = 0x4000, scoped, tag = 'input window, operand 1']
    #allocation5 [shape = 's32[2]{0}', space=sflag, size = 0x8, scoped, tag = 'scoped memory for tpu_custom_call.1']
    %9 = vsyncpa [#allocation3], 0
    %s10 = scalar_lea.sflag [#allocation3], 1
    %11 = vsyncpa %s10, 0
    %12 = vsyncpa [#allocation5], 0
    %s13 = scalar_lea.sflag [#allocation5], 1
    %14 = vsyncpa %s13, 0
    loop: start=0, step=1, limit=8
    $region2: #{tpu_custom_call.1} parent=1 // loop_pre_header
      _
    $region3: #{tpu_custom_call.1} parent=1 // loop_header
      %s16 = sphi 0, %s20
      %p17 = scmp.ge.s32.totalorder %s16, 8
      %s23 = sphi 0, %s42
      %s24 = sphi 0, %s38
      %s25 = sphi 0, %s34
      %s26 = sphi 0, %s23
      %s27 = sphi 0, %s24
      %s28 = sphi 0, %s25
      %s29 = sphi 0, %s26
      %s30 = sphi 0, %s27
      %s31 = sphi 0, %s28
      %s51 = sphi 0, %s53
      %s54 = sphi 0, %s51
      %s55 = sphi 0, %s54
      %s71 = sphi 0, %s55
      %s83 = sphi 0, %s85
      %s86 = sphi 0, %s83
      %s87 = sphi 0, %s86
      %s103 = sphi 0, %s87
      %s111 = sphi 0, %s113
      %s114 = sphi 0, %s111
      %s115 = sphi 0, %s114
      %s131 = sphi 0, %s115
      %s139 = sphi 0, %s141
      %s142 = sphi 0, %s139
      %s143 = sphi 0, %s142
      %s159 = sphi 0, %s143
    $region4: #{tpu_custom_call.1} parent=1 // loop_header_branch
      %19 = sbr.rel (%p17) target = $region8
    $region5: #{tpu_custom_call.1} parent=1 // loop_body
      %s21 = ssub.s32 %s16, 1
      %s22 = ssub.s32 %s16, 2
      %s32 = sadd.s32 1, %s25
      %p33 = scmp.ge.s32.totalorder %s32, 1
      %s34 = scalar_select %p33, 0, %s32
      %s35 = sadd.s32 1, %s24
      %s36 = scalar_select %p33, %s35, %s24
      %p37 = scmp.ge.s32.totalorder %s36, 2
      %s38 = scalar_select %p37, 0, %s36
      %s39 = sadd.s32 1, %s23
      %s40 = scalar_select %p37, %s39, %s23
      %p41 = scmp.ge.s32.totalorder %s40, 3
      %s42 = scalar_select %p41, 0, %s40
      %s43 = sadd.s32 %s23, 1
      %s44 = sadd.s32 %s42, 1
      %s45 = ssub.s32 %s24, %s38
      %s46 = ssub.s32 %s43, %s44
      %s47 = sor.u32 %s45, %s46
      %s48 = ssub.s32 %s25, %s34
      %s49 = sor.u32 %s47, %s48
      %p50 = scmp.eq.s32.totalorder %s49, 0
      %s52 = sadd.s32 %s51, 1
      %s53 = scalar_select %p50, %s51, %s52
      %p56 = pneg %p50
      %p57 = scmp.eq.s32.totalorder %s16, 5
      %p58 = por %p56, %p57
      %p59 = scmp.ne.s32.totalorder %s51, %s54
      %p60 = scmp.eq.s32.totalorder %s16, 0
      %p61 = por %p59, %p60
      %p62 = scmp.ne.s32.totalorder %s51, %s54
      %p63 = scmp.eq.s32.totalorder %s21, 5
      %p64 = por %p62, %p63
      %p65 = scmp.ne.s32.totalorder %s54, %s55
      %p66 = scmp.eq.s32.totalorder %s21, 0
      %p67 = por %p65, %p66
      %p68 = scmp.ne.s32.totalorder %s54, %s55
      %p69 = scmp.eq.s32.totalorder %s22, 5
      %p70 = por %p68, %p69
      %p72 = scmp.ne.s32.totalorder %s55, %s71
      %p73 = scmp.eq.s32.totalorder %s22, 0
      %p74 = por %p72, %p73
      %s75 = sadd.s32 %s23, 1
      %s76 = sadd.s32 %s42, 1
      %s77 = ssub.s32 %s24, %s38
      %s78 = ssub.s32 %s75, %s76
      %s79 = sor.u32 %s77, %s78
      %s80 = ssub.s32 %s25, %s34
      %s81 = sor.u32 %s79, %s80
      %p82 = scmp.eq.s32.totalorder %s81, 0
      %s84 = sadd.s32 %s83, 1
      %s85 = scalar_select %p82, %s83, %s84
      %p88 = pneg %p82
      %p89 = scmp.eq.s32.totalorder %s16, 5
      %p90 = por %p88, %p89
      %p91 = scmp.ne.s32.totalorder %s83, %s86
      %p92 = scmp.eq.s32.totalorder %s16, 0
      %p93 = por %p91, %p92
      %p94 = scmp.ne.s32.totalorder %s83, %s86
      %p95 = scmp.eq.s32.totalorder %s21, 5
      %p96 = por %p94, %p95
      %p97 = scmp.ne.s32.totalorder %s86, %s87
      %p98 = scmp.eq.s32.totalorder %s21, 0
      %p99 = por %p97, %p98
      %p100 = scmp.ne.s32.totalorder %s86, %s87
      %p101 = scmp.eq.s32.totalorder %s22, 5
      %p102 = por %p100, %p101
      %p104 = scmp.ne.s32.totalorder %s87, %s103
      %p105 = scmp.eq.s32.totalorder %s22, 0
      %p106 = por %p104, %p105
      %s107 = ssub.s32 %s23, %s42
      %s108 = ssub.s32 %s24, %s38
      %s109 = sor.u32 %s107, %s108
      %p110 = scmp.eq.s32.totalorder %s109, 0
      %s112 = sadd.s32 %s111, 1
      %s113 = scalar_select %p110, %s111, %s112
      %p116 = pneg %p110
      %p117 = scmp.eq.s32.totalorder %s16, 5
      %p118 = por %p116, %p117
      %p119 = scmp.ne.s32.totalorder %s111, %s114
      %p120 = scmp.eq.s32.totalorder %s16, 0
      %p121 = por %p119, %p120
      %p122 = scmp.ne.s32.totalorder %s111, %s114
      %p123 = scmp.eq.s32.totalorder %s21, 5
      %p124 = por %p122, %p123
      %p125 = scmp.ne.s32.totalorder %s114, %s115
      %p126 = scmp.eq.s32.totalorder %s21, 0
      %p127 = por %p125, %p126
      %p128 = scmp.ne.s32.totalorder %s114, %s115
      %p129 = scmp.eq.s32.totalorder %s22, 5
      %p130 = por %p128, %p129
      %p132 = scmp.ne.s32.totalorder %s115, %s131
      %p133 = scmp.eq.s32.totalorder %s22, 0
      %p134 = por %p132, %p133
      %s135 = ssub.s32 %s23, %s42
      %s136 = ssub.s32 %s24, %s38
      %s137 = sor.u32 %s135, %s136
      %p138 = scmp.eq.s32.totalorder %s137, 0
      %s140 = sadd.s32 %s139, 1
      %s141 = scalar_select %p138, %s139, %s140
      %p144 = pneg %p138
      %p145 = scmp.eq.s32.totalorder %s16, 5
      %p146 = por %p144, %p145
      %p147 = scmp.ne.s32.totalorder %s139, %s142
      %p148 = scmp.eq.s32.totalorder %s16, 0
      %p149 = por %p147, %p148
      %p150 = scmp.ne.s32.totalorder %s139, %s142
      %p151 = scmp.eq.s32.totalorder %s21, 5
      %p152 = por %p150, %p151
      %p153 = scmp.ne.s32.totalorder %s142, %s143
      %p154 = scmp.eq.s32.totalorder %s21, 0
      %p155 = por %p153, %p154
      %p156 = scmp.ne.s32.totalorder %s142, %s143
      %p157 = scmp.eq.s32.totalorder %s22, 5
      %p158 = por %p156, %p157
      %p160 = scmp.ne.s32.totalorder %s143, %s159
      %p161 = scmp.eq.s32.totalorder %s22, 0
      %p162 = por %p160, %p161
      %p163 = scmp.le.s32.totalorder 1, %s16
      %p164 = scmp.lt.s32.totalorder %s16, 7
      %p165 = pnand %p163, %p164
      %p166 = pneg %p165
      // Predicated region
      $region9: #{tpu_custom_call.1} parent=5 // pred_check
        _
      $region10: #{tpu_custom_call.1} parent=5 // pred_check_branch
        %168 = sbr.rel (%p165) target = $region12
      $region11: #{tpu_custom_call.1} parent=5 // pred_region
        %s169 = ssub.s32 %s16, 1
      $region12: #{tpu_custom_call.1} parent=5 // pred_fallthru
        _
      %p170 = scmp.lt.s32.totalorder %s16, 6
      // Predicated region
      $region13: #{tpu_custom_call.1} parent=5 // pred_check
        %p171 = pneg %p170
      $region14: #{tpu_custom_call.1} parent=5 // pred_check_branch
        %173 = sbr.rel (%p171) target = $region16
      $region15: #{tpu_custom_call.1} parent=5 // pred_region
        // Predicated region
        $region17: #{tpu_custom_call.1} parent=15 // pred_check
          %p174 = pneg %p61
        $region18: #{tpu_custom_call.1} parent=15 // pred_check_branch
          %176 = sbr.rel (%p174) target = $region20
        $region19: #{tpu_custom_call.1} parent=15 // pred_region
          %s177 = sand.u32 %s51, 1
          %s178 = scalar_lea.sflag [#allocation3], %s177
          %s179 = sand.u32 %s51, 1
          %s180 = smul.addr %s179, 16
          %s181 = scalar_lea.vmem [#allocation2], %s180
          %s182 = sadd.s32 %s23, 1
          %s183 = smul.u32 2, %s25
          %s185 = ssub.s32 256, 256
          %186 = vsyncadd %s178, %s185
          %s187 = smul.addr %s182, 2
          %s188 = sadd.s32 %s183, %s187
          %s189 = smul.addr %s24, 8
          %s190 = sadd.s32 %s188, %s189
          %s191 = smul.addr %s190, 128
          %s192 = scalar_lea.hbm %s0, %s191
          %s193 = sshll.u32 %s181, 4
          %s194 = int_to_ptr.vmem [resolvable:$true] %s193
          %199 = dma.hbm_to_vmem [thread:$0]  %s192, 256, %s194, %s178, 128, 128, 8
        $region20: #{tpu_custom_call.1} parent=15 // pred_fallthru
          _
        // Predicated region
        $region21: #{tpu_custom_call.1} parent=15 // pred_check
          %p200 = pneg %p93
        $region22: #{tpu_custom_call.1} parent=15 // pred_check_branch
          %202 = sbr.rel (%p200) target = $region24
        $region23: #{tpu_custom_call.1} parent=15 // pred_region
          %s203 = sand.u32 %s83, 1
          %s204 = scalar_lea.sflag [#allocation5], %s203
          %s205 = sand.u32 %s83, 1
          %s206 = smul.addr %s205, 16
          %s207 = scalar_lea.vmem [#allocation4], %s206
          %s208 = sadd.s32 %s23, 1
          %s209 = smul.u32 2, %s25
          %s211 = ssub.s32 256, 256
          %212 = vsyncadd %s204, %s211
          %s213 = smul.addr %s208, 2
          %s214 = sadd.s32 %s209, %s213
          %s215 = smul.addr %s24, 8
          %s216 = sadd.s32 %s214, %s215
          %s217 = smul.addr %s216, 128
          %s218 = scalar_lea.hbm %s1, %s217
          %s219 = sshll.u32 %s207, 4
          %s220 = int_to_ptr.vmem [resolvable:$true] %s219
          %225 = dma.hbm_to_vmem [thread:$0]  %s218, 256, %s220, %s204, 128, 128, 8
        $region24: #{tpu_custom_call.1} parent=15 // pred_fallthru
          _
      $region16: #{tpu_custom_call.1} parent=5 // pred_fallthru
        _
      %p226 = scmp.le.s32.totalorder 1, %s16
      %p227 = scmp.lt.s32.totalorder %s16, 7
      %p228 = pnand %p226, %p227
      %p229 = pneg %p228
      // Predicated region
      $region25: #{tpu_custom_call.1} parent=5 // pred_check
        _
      $region26: #{tpu_custom_call.1} parent=5 // pred_check_branch
        %231 = sbr.rel (%p228) target = $region28
      $region27: #{tpu_custom_call.1} parent=5 // pred_region
        %s232 = ssub.s32 %s16, 1
        %s233 = sand.u32 %s54, 1
        %s234 = scalar_lea.sflag [#allocation3], %s233
        %s235 = sand.u32 %s54, 1
        %s236 = smul.addr %s235, 16
        %s237 = scalar_lea.vmem [#allocation2], %s236
        // Predicated region
        $region29: #{tpu_custom_call.1} parent=27 // pred_check
          %p238 = pneg %p67
        $region30: #{tpu_custom_call.1} parent=27 // pred_check_branch
          %240 = sbr.rel (%p238) target = $region32
        $region31: #{tpu_custom_call.1} parent=27 // pred_region
          %241 = dma.done %s234, 256
        $region32: #{tpu_custom_call.1} parent=27 // pred_fallthru
          _
        %s242 = sand.u32 %s86, 1
        %s243 = scalar_lea.sflag [#allocation5], %s242
        %s244 = sand.u32 %s86, 1
        %s245 = smul.addr %s244, 16
        %s246 = scalar_lea.vmem [#allocation4], %s245
        // Predicated region
        $region33: #{tpu_custom_call.1} parent=27 // pred_check
          %p247 = pneg %p99
        $region34: #{tpu_custom_call.1} parent=27 // pred_check_branch
          %249 = sbr.rel (%p247) target = $region36
        $region35: #{tpu_custom_call.1} parent=27 // pred_region
          %250 = dma.done %s243, 256
        $region36: #{tpu_custom_call.1} parent=27 // pred_fallthru
          _
        %s251 = sand.u32 %s54, 1
        %s252 = scalar_lea.sflag [#allocation3], %s251
        %s253 = sand.u32 %s54, 1
        %s254 = smul.addr %s253, 16
        %s255 = scalar_lea.vmem [#allocation2], %s254
        %p256 = pneg %p67
        %p257 = pneg %p64
        %s258 = sand.u32 %s86, 1
        %s259 = scalar_lea.sflag [#allocation5], %s258
        %s260 = sand.u32 %s86, 1
        %s261 = smul.addr %s260, 16
        %s262 = scalar_lea.vmem [#allocation4], %s261
        %p263 = pneg %p99
        %p264 = pneg %p96
        %p265 = pneg %p127
        %p266 = pneg %p124
        %p267 = scmp.lt.s32.totalorder %s26, 2
        %s268 = scalar_select %p267, %s26, 2
        %p269 = scmp.lt.s32.totalorder %s27, 1
        %s270 = scalar_select %p269, %s27, 1
        %s271 = smul.addr %s268, 2
        %s272 = sadd.s32 %s270, %s271
        %s273 = scalar_lea.vmem %s2, %s272
        %p274 = pneg %p155
        %p275 = pneg %p152
        %p276 = scmp.lt.s32.totalorder %s26, 2
        %s277 = scalar_select %p276, %s26, 2
        %p278 = scmp.lt.s32.totalorder %s27, 1
        %s279 = scalar_select %p278, %s27, 1
        %s280 = smul.addr %s277, 2
        %s281 = sadd.s32 %s279, %s280
        %s282 = scalar_lea.vmem %s3, %s281
        %s283 = sadd.s32 %s26, 1
        %s284 = smul.u32 2, %s28
        %s285 = sadd.s32 %s26, 1
        %s286 = smul.u32 2, %s28
        %p287 = scmp.lt.s32.totalorder %s26, 2
        %s288 = scalar_select %p287, %s26, 2
        %p289 = scmp.lt.s32.totalorder %s27, 1
        %s290 = scalar_select %p289, %s27, 1
        %s291 = smul.addr %s288, 2
        %s292 = sadd.s32 %s290, %s291
        %s293 = scalar_lea.vmem %s2, %s292
        %p294 = scmp.lt.s32.totalorder %s26, 2
        %s295 = scalar_select %p294, %s26, 2
        %p296 = scmp.lt.s32.totalorder %s27, 1
        %s297 = scalar_select %p296, %s27, 1
        %s298 = smul.addr %s295, 2
        %s299 = sadd.s32 %s297, %s298
        %s300 = scalar_lea.vmem %s3, %s299
        %p301 = scmp.eq.s32.totalorder %s28, 0
        // Predicated region
        $region37: #{tpu_custom_call.1} parent=27 // pred_check
          %p302 = pneg %p301
        $region38: #{tpu_custom_call.1} parent=27 // pred_check_branch
          %304 = sbr.rel (%p302) target = $region40
        $region39: #{tpu_custom_call.1} parent=27 // pred_region
          %vm305 = vcmask 0
          %306 = vst.msk [vmem:[%s293] sm:$0x1] %vm305, 0.0
          %307 = vst.msk [vmem:[%s300] sm:$0x1] %vm305, 0.0
        $region40: #{tpu_custom_call.1} parent=27 // pred_fallthru
          _
        %v308 = vld [vmem:[%s237] sm:$0xff]
        %v309 = vld [vmem:[%s237 + $0x8] sm:$0xff]
        %v310 = vld [vmem:[%s246] sm:$0xff]
        %v311 = vld [vmem:[%s246 + $0x8] sm:$0xff]
        %v312 = vld [vmem:[%s293] sm:$0x1]
        %v313 = vmul.f32 %v308, %v310
        %v314 = vmul.f32 %v309, %v311
        %vm315 = vcmask 130048
        %v316 = vsel %vm315, %v313, 0.0
        %v317 = vsel %vm315, %v314, 0.0
        %v318 = vadd.f32 %v316, %v317
        %319 = vadd.xlane.f32.xlu0 %v318
        %v320 = vpop.xlane.xlu0 %319
        %v321 = vrot.slane %v320, 4
        %v322 = vadd.f32 %v320, %v321
        %v323 = vrot.slane %v322, 2
        %v324 = vadd.f32 %v322, %v323
        %v325 = vrot.slane %v324, 1
        %v326 = vadd.f32 %v324, %v325
        %s327 = vtos %v326
        %v328 = vstv %s327
        %v329 = vadd.f32 %v312, %v328
        %vm330 = vcmask 0
        %331 = vst.msk [vmem:[%s293] sm:$0x1] %vm330, %v329
        %v332 = vld [vmem:[%s300] sm:$0x1]
        %v333 = vadd.f32 %v308, %v310
        %v334 = vadd.f32 %v309, %v311
        %v335 = vsel %vm315, %v333, 0.0
        %v336 = vsel %vm315, %v334, 0.0
        %v337 = vadd.f32 %v335, %v336
        %338 = vadd.xlane.f32.xlu0 %v337
        %v339 = vpop.xlane.xlu0 %338
        %v340 = vrot.slane %v339, 4
        %v341 = vadd.f32 %v339, %v340
        %v342 = vrot.slane %v341, 2
        %v343 = vadd.f32 %v341, %v342
        %v344 = vrot.slane %v343, 1
        %v345 = vadd.f32 %v343, %v344
        %s346 = vtos %v345
        %v347 = vstv %s346
        %v348 = vadd.f32 %v332, %v347
        %349 = vst.msk [vmem:[%s300] sm:$0x1] %vm330, %v348
        %p350 = scmp.lt.s32.totalorder %s26, 2
        %s351 = scalar_select %p350, %s26, 2
        %p352 = scmp.lt.s32.totalorder %s27, 1
        %s353 = scalar_select %p352, %s27, 1
        %s354 = smul.addr %s351, 2
        %s355 = sadd.s32 %s353, %s354
        %s356 = scalar_lea.vmem %s2, %s355
        %p357 = scmp.lt.s32.totalorder %s26, 2
        %s358 = scalar_select %p357, %s26, 2
        %p359 = scmp.lt.s32.totalorder %s27, 1
        %s360 = scalar_select %p359, %s27, 1
        %s361 = smul.addr %s358, 2
        %s362 = sadd.s32 %s360, %s361
        %s363 = scalar_lea.vmem %s3, %s362
        // Predicated region
        $region41: #{tpu_custom_call.1} parent=27 // pred_check
          %p364 = pneg %p124
        $region42: #{tpu_custom_call.1} parent=27 // pred_check_branch
          %366 = sbr.rel (%p364) target = $region44
        $region43: #{tpu_custom_call.1} parent=27 // pred_region
          _
        $region44: #{tpu_custom_call.1} parent=27 // pred_fallthru
          _
        // Predicated region
        $region45: #{tpu_custom_call.1} parent=27 // pred_check
          %p367 = pneg %p152
        $region46: #{tpu_custom_call.1} parent=27 // pred_check_branch
          %369 = sbr.rel (%p367) target = $region48
        $region47: #{tpu_custom_call.1} parent=27 // pred_region
          _
        $region48: #{tpu_custom_call.1} parent=27 // pred_fallthru
          _
      $region28: #{tpu_custom_call.1} parent=5 // pred_fallthru
        _
      %p370 = scmp.le.s32.totalorder 2, %s16
      // Predicated region
      $region49: #{tpu_custom_call.1} parent=5 // pred_check
        %p371 = pneg %p370
      $region50: #{tpu_custom_call.1} parent=5 // pred_check_branch
        %373 = sbr.rel (%p371) target = $region52
      $region51: #{tpu_custom_call.1} parent=5 // pred_region
        %s374 = ssub.s32 %s16, 2
        // Predicated region
        $region53: #{tpu_custom_call.1} parent=51 // pred_check
          %p375 = pneg %p130
        $region54: #{tpu_custom_call.1} parent=51 // pred_check_branch
          %377 = sbr.rel (%p375) target = $region56
        $region55: #{tpu_custom_call.1} parent=51 // pred_region
          %p378 = scmp.lt.s32.totalorder %s29, 2
          %s379 = scalar_select %p378, %s29, 2
          %p380 = scmp.lt.s32.totalorder %s30, 1
          %s381 = scalar_select %p380, %s30, 1
          %s382 = smul.addr %s379, 2
          %s383 = sadd.s32 %s381, %s382
          %s384 = scalar_lea.vmem %s2, %s383
        $region56: #{tpu_custom_call.1} parent=51 // pred_fallthru
          _
        // Predicated region
        $region57: #{tpu_custom_call.1} parent=51 // pred_check
          %p385 = pneg %p158
        $region58: #{tpu_custom_call.1} parent=51 // pred_check_branch
          %387 = sbr.rel (%p385) target = $region60
        $region59: #{tpu_custom_call.1} parent=51 // pred_region
          %p388 = scmp.lt.s32.totalorder %s29, 2
          %s389 = scalar_select %p388, %s29, 2
          %p390 = scmp.lt.s32.totalorder %s30, 1
          %s391 = scalar_select %p390, %s30, 1
          %s392 = smul.addr %s389, 2
          %s393 = sadd.s32 %s391, %s392
          %s394 = scalar_lea.vmem %s3, %s393
        $region60: #{tpu_custom_call.1} parent=51 // pred_fallthru
          _
      $region52: #{tpu_custom_call.1} parent=5 // pred_fallthru
        _
    $region6: #{tpu_custom_call.1} parent=1 // loop_footer
      %s20 = sadd.s32 1, %s16
    $region7: #{tpu_custom_call.1} parent=1 // loop_footer_branch
      %15 = sbr.rel target = $region3
    $region8: #{tpu_custom_call.1} parent=1 // loop_exit
      _
    %395 = vsyncpa [#allocation3], 1
    %s396 = scalar_lea.sflag [#allocation3], 1
    %397 = vsyncpa %s396, 1
    %398 = vsyncpa [#allocation5], 1
    %s399 = scalar_lea.sflag [#allocation5], 1
    %400 = vsyncpa %s399, 1

</llo_original>
